<compile_context>
chip_gen: v7x
topology: tpu7x:2x2x1
jax: 0.10.0
libtpu: 0.0.40
codegen_flags: <defaults>
</compile_context>

<pallas_src>
import functools
import math

import jax
import jax.numpy as jnp
import numpy as np
from jax.experimental import pallas as pl
from jax.experimental.pallas import tpu as pltpu

HIDDEN = 128
LAYER_NUM = 2          # number of extra (Linear(128,128) + ReLU) blocks
DEFAULT_TB = 2048      # batch tile: large M is the only MXU-filling lever here


def _round_up(x, m):
    return ((x + m - 1) // m) * m


def _actor_kernel(x_ref, w1_ref, b1_ref, wh_ref, bh_ref, wo_ref, bo_ref, o_ref,
                  *, layer_num, max_action):
    # First layer: Linear(in_dim, 128) + ReLU.  bf16 operands, f32 accumulate.
    x = x_ref[...].astype(jnp.bfloat16)
    h = jnp.dot(x, w1_ref[...], preferred_element_type=jnp.float32)
    h = jnp.maximum(h + b1_ref[...], 0.0)                       # f32 on VPU

    # Hidden layers: layer_num x (Linear(128, 128) + ReLU)
    for l in range(layer_num):
        h = jnp.dot(h.astype(jnp.bfloat16), wh_ref[l],
                    preferred_element_type=jnp.float32)
        h = jnp.maximum(h + bh_ref[l], 0.0)

    # Output layer: Linear(128, out_dim), then max_action * tanh (EUP).
    logits = jnp.dot(h.astype(jnp.bfloat16), wo_ref[...],
                     preferred_element_type=jnp.float32)
    logits = logits + bo_ref[...]
    o_ref[...] = max_action * jnp.tanh(logits)


def actor_forward(s, params, *, layer_num=LAYER_NUM, max_action=1.0,
                  tb=DEFAULT_TB):
    """s: (B, *state_shape) float32; returns (B, out_dim) float32 actions."""
    w1, b1, wh, bh, wo, bo = params
    B = s.shape[0]
    x = s.reshape(B, -1).astype(jnp.float32)      # s.view(batch, -1)
    in_dim = x.shape[1]
    out_dim = wo.shape[1]

    # Batch tile: as big as possible (amortizes ~0.35 us/step overhead), but
    # clamp so grid >= 2 when the batch allows it (v7x has 2 TCs sharded over
    # the "parallel" axis).  Always a multiple of 8 (sublane alignment).
    tb_eff = min(tb, _round_up(B, 8))
    if B > 8:
        tb_eff = min(tb_eff, _round_up((B + 1) // 2, 8))
    grid = (pl.cdiv(B, tb_eff),)   # partial trailing block: stores are masked

    L = max(layer_num, 1)  # placeholder slot when layer_num == 0

    # VMEM budget: bf16 weights (double-buffered by default) + f32 biases
    # + double-buffered x/out tiles + activation headroom.
    weight_bytes = ((in_dim * HIDDEN + L * HIDDEN * HIDDEN + HIDDEN * out_dim) * 2
                    + (HIDDEN + L * HIDDEN + out_dim) * 4)
    io_bytes = 2 * (tb_eff * in_dim + tb_eff * out_dim) * 4
    act_bytes = 4 * tb_eff * HIDDEN * 4
    vmem_limit = int(min(64 << 20,
                         2 * weight_bytes + io_bytes + act_bytes + (8 << 20)))

    cost = pl.CostEstimate(
        flops=2 * B * (in_dim * HIDDEN + layer_num * HIDDEN * HIDDEN
                       + HIDDEN * out_dim),
        transcendentals=B * out_dim,
        bytes_accessed=B * in_dim * 4 + B * out_dim * 4 + weight_bytes,
    )

    kernel = functools.partial(_actor_kernel, layer_num=layer_num,
                               max_action=float(max_action))

    out = pl.pallas_call(
        kernel,
        out_shape=jax.ShapeDtypeStruct((B, out_dim), jnp.float32),
        grid_spec=pltpu.PrefetchScalarGridSpec(
            num_scalar_prefetch=0,
            grid=grid,
            in_specs=[
                pl.BlockSpec((tb_eff, in_dim), lambda i: (i, 0)),
                pl.BlockSpec((in_dim, HIDDEN), lambda i: (0, 0)),
                pl.BlockSpec((1, HIDDEN), lambda i: (0, 0)),
                pl.BlockSpec((L, HIDDEN, HIDDEN), lambda i: (0, 0, 0)),
                pl.BlockSpec((L, 1, HIDDEN), lambda i: (0, 0, 0)),
                pl.BlockSpec((HIDDEN, out_dim), lambda i: (0, 0)),
                pl.BlockSpec((1, out_dim), lambda i: (0, 0)),
            ],
            out_specs=pl.BlockSpec((tb_eff, out_dim), lambda i: (i, 0)),
        ),
        compiler_params=pltpu.CompilerParams(
            dimension_semantics=("parallel",),
            vmem_limit_bytes=vmem_limit),
        cost_estimate=cost,
    )(x, w1, b1, wh, bh, wo, bo)
    return out


def init_params(key, in_dim, out_dim, layer_num=LAYER_NUM):
    """PyTorch-style init: U(-1/sqrt(fan_in), 1/sqrt(fan_in)).
    Weights are stored bf16 (MXU operands); biases stay f32."""
    keys = jax.random.split(key, 2 + 2 * layer_num + 2)

    def lin(k_w, k_b, fan_in, fan_out):
        bound = 1.0 / math.sqrt(fan_in)
        w = jax.random.uniform(k_w, (fan_in, fan_out), jnp.float32, -bound, bound)
        b = jax.random.uniform(k_b, (1, fan_out), jnp.float32, -bound, bound)
        return w.astype(jnp.bfloat16), b

    w1, b1 = lin(keys[0], keys[1], in_dim, HIDDEN)

    wh_list, bh_list = [], []
    for l in range(layer_num):
        w, b = lin(keys[2 + 2 * l], keys[3 + 2 * l], HIDDEN, HIDDEN)
        wh_list.append(w)
        bh_list.append(b)
    if layer_num > 0:
        wh = jnp.stack(wh_list, axis=0)                       # (L, 128, 128) bf16
        bh = jnp.stack(bh_list, axis=0)                       # (L, 1, 128)  f32
    else:
        wh = jnp.zeros((1, HIDDEN, HIDDEN), jnp.bfloat16)     # unused placeholder
        bh = jnp.zeros((1, 1, HIDDEN), jnp.float32)

    wo, bo = lin(keys[-2], keys[-1], HIDDEN, out_dim)         # (128, out), (1, out)
    return w1, b1, wh, bh, wo, bo


def reference_forward(s, params, layer_num=LAYER_NUM, max_action=1.0):
    """Pure-JAX reference mirroring the kernel's bf16-matmul / f32-accumulate math."""
    w1, b1, wh, bh, wo, bo = params
    x = s.reshape(s.shape[0], -1).astype(jnp.float32)
    h = jnp.dot(x.astype(jnp.bfloat16), w1, preferred_element_type=jnp.float32)
    h = jnp.maximum(h + b1, 0.0)
    for l in range(layer_num):
        h = jnp.dot(h.astype(jnp.bfloat16), wh[l],
                    preferred_element_type=jnp.float32)
        h = jnp.maximum(h + bh[l], 0.0)
    logits = jnp.dot(h.astype(jnp.bfloat16), wo,
                     preferred_element_type=jnp.float32) + bo
    return max_action * jnp.tanh(logits)


if __name__ == "__main__":
    key = jax.random.PRNGKey(0)
    k_s, k_p = jax.random.split(key, 2)

    batch = 8
    state_shape = (3, 4)    # prod = 12
    action_shape = (4,)     # prod = 4
    max_action = 2.0
    in_dim = int(np.prod(state_shape))
    out_dim = int(np.prod(action_shape))

    s = jax.random.normal(k_s, (batch,) + state_shape, jnp.float32)
    params = init_params(k_p, in_dim, out_dim, LAYER_NUM)

    logits = actor_forward(s, params, layer_num=LAYER_NUM, max_action=max_action)
    result = (logits, None)   # mirrors the module's (logits, None) return
    jax.block_until_ready(logits)

    ref = reference_forward(s, params, LAYER_NUM, max_action)
    assert logits.shape == (batch, out_dim), logits.shape
    # bf16 matmul operands => relaxed tolerance vs. the f32-exact original.
    np.testing.assert_allclose(np.asarray(logits), np.asarray(ref),
                               rtol=2e-2, atol=2e-2)
    print("KERNEL_OK")
</pallas_src>

<mosaic_0001>
module attributes {stable_mosaic.version = 11 : i64} {
  func.func @_actor_kernel(%arg0: i32, %arg1: memref<8x12xf32, #tpu.memory_space<vmem>>, %arg2: memref<12x128xbf16, #tpu.memory_space<vmem>>, %arg3: memref<1x128xf32, #tpu.memory_space<vmem>>, %arg4: memref<2x128x128xbf16, #tpu.memory_space<vmem>>, %arg5: memref<2x1x128xf32, #tpu.memory_space<vmem>>, %arg6: memref<128x4xbf16, #tpu.memory_space<vmem>>, %arg7: memref<1x4xf32, #tpu.memory_space<vmem>>, %arg8: memref<8x4xf32, #tpu.memory_space<vmem>>) attributes {dimension_semantics = [#tpu.dimension_semantics<parallel>], iteration_bounds = array<i64: 1>, scalar_prefetch = 0 : i64, scratch_operands = 0 : i64, tpu.core_type = #tpu.core_type<tc>, window_params = [{transform_indices = @transform_0, window_bounds = array<i64: 8, 12>}, {pipeline_mode = #tpu.pipeline_mode<synchronous>, transform_indices = @transform_1, window_bounds = array<i64: 12, 128>}, {pipeline_mode = #tpu.pipeline_mode<synchronous>, transform_indices = @transform_2, window_bounds = array<i64: 1, 128>}, {pipeline_mode = #tpu.pipeline_mode<synchronous>, transform_indices = @transform_3, window_bounds = array<i64: 2, 128, 128>}, {pipeline_mode = #tpu.pipeline_mode<synchronous>, transform_indices = @transform_4, window_bounds = array<i64: 2, 1, 128>}, {pipeline_mode = #tpu.pipeline_mode<synchronous>, transform_indices = @transform_5, window_bounds = array<i64: 128, 4>}, {pipeline_mode = #tpu.pipeline_mode<synchronous>, transform_indices = @transform_6, window_bounds = array<i64: 1, 4>}, {transform_indices = @transform_7, window_bounds = array<i64: 8, 4>}]} {
    %c0 = arith.constant 0 : index
    %c0_0 = arith.constant 0 : index
    %0 = vector.load %arg1[%c0, %c0_0] : memref<8x12xf32, #tpu.memory_space<vmem>>, vector<8x12xf32>
    %1 = arith.truncf %0 : vector<8x12xf32> to vector<8x12xbf16>
    %c0_1 = arith.constant 0 : index
    %c0_2 = arith.constant 0 : index
    %2 = vector.load %arg2[%c0_1, %c0_2] : memref<12x128xbf16, #tpu.memory_space<vmem>>, vector<12x128xbf16>
    %cst = arith.constant dense<0.000000e+00> : vector<8x128xf32>
    %3 = tpu.matmul %1, %2, %cst {dimension_numbers = #tpu.dot_dimension_numbers<[1], [0], [0], [1], [0, 0, 1, 1], [], []>} : vector<8x12xbf16>, vector<12x128xbf16>, vector<8x128xf32> -> vector<8x128xf32>
    %c0_3 = arith.constant 0 : index
    %c0_4 = arith.constant 0 : index
    %4 = vector.load %arg3[%c0_3, %c0_4] : memref<1x128xf32, #tpu.memory_space<vmem>>, vector<1x128xf32>
    %5 = vector.broadcast %4 : vector<1x128xf32> to vector<8x128xf32>
    %6 = arith.addf %3, %5 : vector<8x128xf32>
    %cst_5 = arith.constant 0.000000e+00 : f32
    %7 = vector.broadcast %cst_5 : f32 to vector<8x128xf32>
    %8 = arith.maximumf %6, %7 : vector<8x128xf32>
    %9 = arith.truncf %8 : vector<8x128xf32> to vector<8x128xbf16>
    %c0_6 = arith.constant 0 : index
    %c0_7 = arith.constant 0 : index
    %c0_8 = arith.constant 0 : index
    %10 = vector.load %arg4[%c0_6, %c0_7, %c0_8] : memref<2x128x128xbf16, #tpu.memory_space<vmem>>, vector<1x128x128xbf16>
    %11 = vector.shape_cast %10 : vector<1x128x128xbf16> to vector<128x128xbf16>
    %cst_9 = arith.constant dense<0.000000e+00> : vector<8x128xf32>
    %12 = tpu.matmul %9, %11, %cst_9 {dimension_numbers = #tpu.dot_dimension_numbers<[1], [0], [0], [1], [0, 0, 1, 1], [], []>} : vector<8x128xbf16>, vector<128x128xbf16>, vector<8x128xf32> -> vector<8x128xf32>
    %c0_10 = arith.constant 0 : index
    %c0_11 = arith.constant 0 : index
    %c0_12 = arith.constant 0 : index
    %13 = vector.load %arg5[%c0_10, %c0_11, %c0_12] : memref<2x1x128xf32, #tpu.memory_space<vmem>>, vector<1x1x128xf32>
    %14 = vector.shape_cast %13 : vector<1x1x128xf32> to vector<1x128xf32>
    %15 = vector.broadcast %14 : vector<1x128xf32> to vector<8x128xf32>
    %16 = arith.addf %12, %15 : vector<8x128xf32>
    %cst_13 = arith.constant 0.000000e+00 : f32
    %17 = vector.broadcast %cst_13 : f32 to vector<8x128xf32>
    %18 = arith.maximumf %16, %17 : vector<8x128xf32>
    %19 = arith.truncf %18 : vector<8x128xf32> to vector<8x128xbf16>
    %c1 = arith.constant 1 : index
    %c0_14 = arith.constant 0 : index
    %c0_15 = arith.constant 0 : index
    %20 = vector.load %arg4[%c1, %c0_14, %c0_15] : memref<2x128x128xbf16, #tpu.memory_space<vmem>>, vector<1x128x128xbf16>
    %21 = vector.shape_cast %20 : vector<1x128x128xbf16> to vector<128x128xbf16>
    %cst_16 = arith.constant dense<0.000000e+00> : vector<8x128xf32>
    %22 = tpu.matmul %19, %21, %cst_16 {dimension_numbers = #tpu.dot_dimension_numbers<[1], [0], [0], [1], [0, 0, 1, 1], [], []>} : vector<8x128xbf16>, vector<128x128xbf16>, vector<8x128xf32> -> vector<8x128xf32>
    %c1_17 = arith.constant 1 : index
    %c0_18 = arith.constant 0 : index
    %c0_19 = arith.constant 0 : index
    %23 = vector.load %arg5[%c1_17, %c0_18, %c0_19] : memref<2x1x128xf32, #tpu.memory_space<vmem>>, vector<1x1x128xf32>
    %24 = vector.shape_cast %23 : vector<1x1x128xf32> to vector<1x128xf32>
    %25 = vector.broadcast %24 : vector<1x128xf32> to vector<8x128xf32>
    %26 = arith.addf %22, %25 : vector<8x128xf32>
    %cst_20 = arith.constant 0.000000e+00 : f32
    %27 = vector.broadcast %cst_20 : f32 to vector<8x128xf32>
    %28 = arith.maximumf %26, %27 : vector<8x128xf32>
    %29 = arith.truncf %28 : vector<8x128xf32> to vector<8x128xbf16>
    %c0_21 = arith.constant 0 : index
    %c0_22 = arith.constant 0 : index
    %30 = vector.load %arg6[%c0_21, %c0_22] : memref<128x4xbf16, #tpu.memory_space<vmem>>, vector<128x4xbf16>
    %cst_23 = arith.constant dense<0.000000e+00> : vector<8x4xf32>
    %31 = tpu.matmul %29, %30, %cst_23 {dimension_numbers = #tpu.dot_dimension_numbers<[1], [0], [0], [1], [0, 0, 1, 1], [], []>} : vector<8x128xbf16>, vector<128x4xbf16>, vector<8x4xf32> -> vector<8x4xf32>
    %c0_24 = arith.constant 0 : index
    %c0_25 = arith.constant 0 : index
    %32 = vector.load %arg7[%c0_24, %c0_25] : memref<1x4xf32, #tpu.memory_space<vmem>>, vector<1x4xf32>
    %33 = vector.broadcast %32 : vector<1x4xf32> to vector<8x4xf32>
    %34 = arith.addf %31, %33 : vector<8x4xf32>
    %35 = math.tanh %34 : vector<8x4xf32>
    %cst_26 = arith.constant 2.000000e+00 : f32
    %36 = vector.broadcast %cst_26 : f32 to vector<8x4xf32>
    %37 = arith.mulf %36, %35 : vector<8x4xf32>
    %c0_27 = arith.constant 0 : index
    %c0_28 = arith.constant 0 : index
    %38 = vector.load %arg8[%c0_27, %c0_28] : memref<8x4xf32, #tpu.memory_space<vmem>>, vector<8x4xf32>
    tpu.vector_store %arg8[%c0_27, %c0_28], %37 {strides = array<i32>} : memref<8x4xf32, #tpu.memory_space<vmem>>, vector<8x4xf32>,
    return
  }
  func.func @transform_0(%arg0: i32) -> (i32, i32) {
    %c0_i32 = arith.constant 0 : i32
    %c0_i32_0 = arith.constant 0 : i32
    return %arg0, %c0_i32 : i32, i32
  }
  func.func @transform_1(%arg0: i32) -> (i32, i32) {
    %c0_i32 = arith.constant 0 : i32
    %c0_i32_0 = arith.constant 0 : i32
    %c0_i32_1 = arith.constant 0 : i32
    return %c0_i32, %c0_i32_0 : i32, i32
  }
  func.func @transform_2(%arg0: i32) -> (i32, i32) {
    %c0_i32 = arith.constant 0 : i32
    %c0_i32_0 = arith.constant 0 : i32
    %c0_i32_1 = arith.constant 0 : i32
    return %c0_i32, %c0_i32_0 : i32, i32
  }
  func.func @transform_3(%arg0: i32) -> (i32, i32, i32) {
    %c0_i32 = arith.constant 0 : i32
    %c0_i32_0 = arith.constant 0 : i32
    %c0_i32_1 = arith.constant 0 : i32
    %c0_i32_2 = arith.constant 0 : i32
    return %c0_i32, %c0_i32_0, %c0_i32_1 : i32, i32, i32
  }
  func.func @transform_4(%arg0: i32) -> (i32, i32, i32) {
    %c0_i32 = arith.constant 0 : i32
    %c0_i32_0 = arith.constant 0 : i32
    %c0_i32_1 = arith.constant 0 : i32
    %c0_i32_2 = arith.constant 0 : i32
    return %c0_i32, %c0_i32_0, %c0_i32_1 : i32, i32, i32
  }
  func.func @transform_5(%arg0: i32) -> (i32, i32) {
    %c0_i32 = arith.constant 0 : i32
    %c0_i32_0 = arith.constant 0 : i32
    %c0_i32_1 = arith.constant 0 : i32
    return %c0_i32, %c0_i32_0 : i32, i32
  }
  func.func @transform_6(%arg0: i32) -> (i32, i32) {
    %c0_i32 = arith.constant 0 : i32
    %c0_i32_0 = arith.constant 0 : i32
    %c0_i32_1 = arith.constant 0 : i32
    return %c0_i32, %c0_i32_0 : i32, i32
  }
  func.func @transform_7(%arg0: i32) -> (i32, i32) {
    %c0_i32 = arith.constant 0 : i32
    %c0_i32_0 = arith.constant 0 : i32
    return %arg0, %c0_i32 : i32, i32
  }
}

</mosaic_0001>

<llo_original>
// kernel: tpu_custom_call.1
$region0: #{tpu_custom_call.1}
  #allocation0 [shape = 'u32[]', space=smem, size = 0x4, offset = 0x4, fixed_abs, tag = 'smem constant byte address 0x4 - core index']
  #allocation1 [shape = 'u32[144,128]{1,0:T(1,128)}', space=vmem, size = 0x12000, scoped, tag = 'internal scratch']
  %s0 = inlined_call_operand.vmem [shape: f32[8,12], index: 0, kind: input, shape index: {}]
  %s1 = inlined_call_operand.vmem [shape: bf16[12,128], index: 1, kind: input, shape index: {}]
  %s2 = inlined_call_operand.vmem [shape: f32[1,128], index: 2, kind: input, shape index: {}]
  %s3 = inlined_call_operand.hbm [shape: bf16[2,128,128], index: 3, kind: input, shape index: {}]
  %s4 = inlined_call_operand.vmem [shape: f32[2,1,128], index: 4, kind: input, shape index: {}]
  %s5 = inlined_call_operand.vmem [shape: bf16[128,4], index: 5, kind: input, shape index: {}]
  %s6 = inlined_call_operand.vmem [shape: f32[1,4], index: 6, kind: input, shape index: {}]
  %s7 = inlined_call_operand.vmem [shape: f32[8,4], index: 7, kind: output, shape index: {}]
  %s8 = sld [smem:[#allocation0]]
  $region42: #{tpu_custom_call.1} parent=0
    _
  %s10 = ssub.s32 1, %s8
  %s11 = scalar_select 0, %s10, %s8
  $region1: #{tpu_custom_call.1} parent=0
    #allocation2 [shape = 'u8[65536]{0}', space=vmem, size = 0x10000, scoped, tag = 'input window, operand 3, single buffered']
    #allocation3 [shape = 's32[1]{0}', space=sflag, size = 0x4, scoped, tag = 'scoped memory for tpu_custom_call.1']
    %12 = vsyncpa [#allocation3], 0
    // Predicated region
    $region2: #{tpu_custom_call.1} parent=1 // pred_check
      _
    $region3: #{tpu_custom_call.1} parent=1 // pred_check_branch
      %14 = sbr.rel (0) target = $region5
    $region4: #{tpu_custom_call.1} parent=1 // pred_region
      _
    $region5: #{tpu_custom_call.1} parent=1 // pred_fallthru
      _
    // Predicated region
    $region6: #{tpu_custom_call.1} parent=1 // pred_check
      _
    $region7: #{tpu_custom_call.1} parent=1 // pred_check_branch
      %16 = sbr.rel (0) target = $region9
    $region8: #{tpu_custom_call.1} parent=1 // pred_region
      _
    $region9: #{tpu_custom_call.1} parent=1 // pred_fallthru
      _
    // Predicated region
    $region10: #{tpu_custom_call.1} parent=1 // pred_check
      _
    $region11: #{tpu_custom_call.1} parent=1 // pred_check_branch
      %18 = sbr.rel (0) target = $region13
    $region12: #{tpu_custom_call.1} parent=1 // pred_region
      _
    $region13: #{tpu_custom_call.1} parent=1 // pred_fallthru
      _
    // Predicated region
    $region14: #{tpu_custom_call.1} parent=1 // pred_check
      _
    $region15: #{tpu_custom_call.1} parent=1 // pred_check_branch
      %20 = sbr.rel (0) target = $region17
    $region16: #{tpu_custom_call.1} parent=1 // pred_region
      %s22 = ssub.s32 2048, 2048
      %23 = vsyncadd [#allocation3], %s22
      %s24 = sshll.u32 [#allocation2], 4
      %s25 = int_to_ptr.vmem [resolvable:$true] %s24
      %30 = dma.hbm_to_vmem [thread:$0]  %s3, 2048, %s25, [#allocation3], 64, 64, 4
    $region17: #{tpu_custom_call.1} parent=1 // pred_fallthru
      _
    // Predicated region
    $region18: #{tpu_custom_call.1} parent=1 // pred_check
      _
    $region19: #{tpu_custom_call.1} parent=1 // pred_check_branch
      %32 = sbr.rel (0) target = $region21
    $region20: #{tpu_custom_call.1} parent=1 // pred_region
      _
    $region21: #{tpu_custom_call.1} parent=1 // pred_fallthru
      _
    // Predicated region
    $region22: #{tpu_custom_call.1} parent=1 // pred_check
      _
    $region23: #{tpu_custom_call.1} parent=1 // pred_check_branch
      %34 = sbr.rel (0) target = $region25
    $region24: #{tpu_custom_call.1} parent=1 // pred_region
      _
    $region25: #{tpu_custom_call.1} parent=1 // pred_fallthru
      _
    // Predicated region
    $region26: #{tpu_custom_call.1} parent=1 // pred_check
      _
    $region27: #{tpu_custom_call.1} parent=1 // pred_check_branch
      %36 = sbr.rel (0) target = $region29
    $region28: #{tpu_custom_call.1} parent=1 // pred_region
      _
    $region29: #{tpu_custom_call.1} parent=1 // pred_fallthru
      _
    // Predicated region
    $region30: #{tpu_custom_call.1} parent=1 // pred_check
      _
    $region31: #{tpu_custom_call.1} parent=1 // pred_check_branch
      %38 = sbr.rel (0) target = $region33
    $region32: #{tpu_custom_call.1} parent=1 // pred_region
      %39 = dma.done [#allocation3], 2048
    $region33: #{tpu_custom_call.1} parent=1 // pred_fallthru
      _
    %v41 = vld [vmem:[%s0] sm:$0xff]
    %v42 = vpack.c.bf16 %v41, %v41
    %v43 = vld [vmem:[%s1] sm:$0xf]
    %v44 = vld [vmem:[%s1 + $0x4] sm:$0x3]
    %v45 = vld [vmem:[%s2] sm:$0x1]
    %v47 = vlaneseq
    %v48 = vshrl.u32 %v47, 7
    %v49 = vsub.s32 0, %v48
    %v50 = vrot.slane %v45, %v49
    %v54 = vunpack.c.l.b16 %v43
    %v55 = vunpack.c.l.b16 %v44
    %v56 = vpack.c.b16 %v55, %v54
    %vm57 = vcmask 97280
    %v59 = vsel %vm57, %v42, 0
    %vm61 = vcmask 1045504
    %v63 = vsel %vm61, %v56, 0
    %65 = vmatprep.subr.bf16.mxu0 0
    %66 = vmatpush1.bf16.msra.mxu0 %v63
    %67 = vmatprep.subr.bf16.mxu0 0
    %68 = vmatpush1.bf16.msra.mxu0 0
    %69 = vmatprep.subr.bf16.mxu0 0
    %70 = vmatpush1.bf16.msra.mxu0 0
    %71 = vmatprep.subr.bf16.mxu0 0
    %72 = vmatpush1.bf16.msra.mxu0 0
    %73 = vmatprep.subr.bf16.mxu0 0
    %74 = vmatpush1.bf16.msra.mxu0 0
    %75 = vmatprep.subr.bf16.mxu0 0
    %76 = vmatpush1.bf16.msra.mxu0 0
    %77 = vmatprep.subr.bf16.mxu0 0
    %78 = vmatpush1.bf16.msra.mxu0 0
    %79 = vmatprep.subr.bf16.mxu0 0
    %80 = vmatpush1.bf16.msra.mxu0 0
    %81 = vmatprep.subr.bf16.mxu0 0
    %82 = vmatpush1.bf16.msra.mxu0 0
    %83 = vmatprep.subr.bf16.mxu0 0
    %84 = vmatpush1.bf16.msra.mxu0 0
    %85 = vmatprep.subr.bf16.mxu0 0
    %86 = vmatpush1.bf16.msra.mxu0 0
    %87 = vmatprep.subr.bf16.mxu0 0
    %88 = vmatpush1.bf16.msra.mxu0 0
    %89 = vmatprep.subr.bf16.mxu0 0
    %90 = vmatpush1.bf16.msra.mxu0 0
    %91 = vmatprep.subr.bf16.mxu0 0
    %92 = vmatpush1.bf16.msra.mxu0 0
    %93 = vmatprep.subr.bf16.mxu0 0
    %94 = vmatpush1.bf16.msra.mxu0 0
    %95 = vmatprep.subr.bf16.mxu0 0
    %96 = vmatpush1.bf16.msra.mxu0 0
    %97 = vmatprep.mubr.bf16.mxu0 0
    %98 = vmatmul.mubr.bf16.gmra.mrb[0].mxu0 %v59
    %v99 = vpop.f32.mrb[0].mxu0
    %v100 = vadd.f32 %v50, %v99
    %v101 = vpop.f32.mrb[0].mxu0
    %v102 = vpop.f32.mrb[0].mxu0
    %v103 = vpop.f32.mrb[0].mxu0
    %104 = vdwg.mxu0
    %v105 = vmax.f32 %v100, 0.0
    %v106 = vpack.c.bf16 %v105, %v105
    %v107 = vld [vmem:[#allocation2] sm:$0xf]
    %v108 = vld [vmem:[#allocation2 + $0x4] sm:$0xf]
    %v109 = vld [vmem:[#allocation2 + $0x8] sm:$0xf]
    %v110 = vld [vmem:[#allocation2 + $0xc] sm:$0xf]
    %v111 = vld [vmem:[#allocation2 + $0x10] sm:$0xf]
    %v112 = vld [vmem:[#allocation2 + $0x14] sm:$0xf]
    %v113 = vld [vmem:[#allocation2 + $0x18] sm:$0xf]
    %v114 = vld [vmem:[#allocation2 + $0x1c] sm:$0xf]
    %v115 = vld [vmem:[#allocation2 + $0x20] sm:$0xf]
    %v116 = vld [vmem:[#allocation2 + $0x24] sm:$0xf]
    %v117 = vld [vmem:[#allocation2 + $0x28] sm:$0xf]
    %v118 = vld [vmem:[#allocation2 + $0x2c] sm:$0xf]
    %v119 = vld [vmem:[#allocation2 + $0x30] sm:$0xf]
    %v120 = vld [vmem:[#allocation2 + $0x34] sm:$0xf]
    %v121 = vld [vmem:[#allocation2 + $0x38] sm:$0xf]
    %v122 = vld [vmem:[#allocation2 + $0x3c] sm:$0xf]
    %v123 = vld [vmem:[%s4] sm:$0x1]
    %v125 = vlaneseq
    %v126 = vshrl.u32 %v125, 7
    %v127 = vsub.s32 0, %v126
    %v128 = vrot.slane %v123, %v127
    %v146 = vunpack.c.l.b16 %v107
    %v147 = vunpack.c.l.b16 %v108
    %v148 = vunpack.c.l.b16 %v109
    %v149 = vunpack.c.l.b16 %v110
    %v150 = vunpack.c.l.b16 %v111
    %v151 = vunpack.c.l.b16 %v112
    %v152 = vunpack.c.l.b16 %v113
    %v153 = vunpack.c.l.b16 %v114
    %v154 = vunpack.c.l.b16 %v115
    %v155 = vunpack.c.l.b16 %v116
    %v156 = vunpack.c.l.b16 %v117
    %v157 = vunpack.c.l.b16 %v118
    %v158 = vunpack.c.l.b16 %v119
    %v159 = vunpack.c.l.b16 %v120
    %v160 = vunpack.c.l.b16 %v121
    %v161 = vunpack.c.l.b16 %v122
    %v162 = vpack.c.b16 %v147, %v146
    %v163 = vpack.c.b16 %v149, %v148
    %v164 = vpack.c.b16 %v151, %v150
    %v165 = vpack.c.b16 %v153, %v152
    %v166 = vpack.c.b16 %v155, %v154
    %v167 = vpack.c.b16 %v157, %v156
    %v168 = vpack.c.b16 %v159, %v158
    %v169 = vpack.c.b16 %v161, %v160
    %178 = vmatprep.subr.bf16.mxu0 0
    %179 = vmatpush1.bf16.msra.mxu0 %v162
    %180 = vmatprep.subr.bf16.mxu0 0
    %181 = vmatpush1.bf16.msra.mxu0 %v163
    %182 = vmatprep.subr.bf16.mxu0 0
    %183 = vmatpush1.bf16.msra.mxu0 %v164
    %184 = vmatprep.subr.bf16.mxu0 0
    %185 = vmatpush1.bf16.msra.mxu0 %v165
    %186 = vmatprep.subr.bf16.mxu0 0
    %187 = vmatpush1.bf16.msra.mxu0 %v166
    %188 = vmatprep.subr.bf16.mxu0 0
    %189 = vmatpush1.bf16.msra.mxu0 %v167
    %190 = vmatprep.subr.bf16.mxu0 0
    %191 = vmatpush1.bf16.msra.mxu0 %v168
    %192 = vmatprep.subr.bf16.mxu0 0
    %193 = vmatpush1.bf16.msra.mxu0 %v169
    %194 = vmatprep.subr.bf16.mxu0 0
    %195 = vmatpush1.bf16.msra.mxu0 0
    %196 = vmatprep.subr.bf16.mxu0 0
    %197 = vmatpush1.bf16.msra.mxu0 0
    %198 = vmatprep.subr.bf16.mxu0 0
    %199 = vmatpush1.bf16.msra.mxu0 0
    %200 = vmatprep.subr.bf16.mxu0 0
    %201 = vmatpush1.bf16.msra.mxu0 0
    %202 = vmatprep.subr.bf16.mxu0 0
    %203 = vmatpush1.bf16.msra.mxu0 0
    %204 = vmatprep.subr.bf16.mxu0 0
    %205 = vmatpush1.bf16.msra.mxu0 0
    %206 = vmatprep.subr.bf16.mxu0 0
    %207 = vmatpush1.bf16.msra.mxu0 0
    %208 = vmatprep.subr.bf16.mxu0 0
    %209 = vmatpush1.bf16.msra.mxu0 0
    %210 = vmatprep.mubr.bf16.mxu0 0
    %211 = vmatmul.mubr.bf16.gmra.mrb[0].mxu0 %v106
    %v212 = vpop.f32.mrb[0].mxu0
    %v213 = vadd.f32 %v128, %v212
    %v214 = vpop.f32.mrb[0].mxu0
    %v215 = vpop.f32.mrb[0].mxu0
    %v216 = vpop.f32.mrb[0].mxu0
    %217 = vdwg.mxu0
    %v218 = vmax.f32 %v213, 0.0
    %v219 = vpack.c.bf16 %v218, %v218
    %s220 = scalar_lea.vmem [#allocation2], 64
    %v221 = vld [vmem:[%s220] sm:$0xf]
    %v222 = vld [vmem:[%s220 + $0x4] sm:$0xf]
    %v223 = vld [vmem:[%s220 + $0x8] sm:$0xf]
    %v224 = vld [vmem:[%s220 + $0xc] sm:$0xf]
    %v225 = vld [vmem:[%s220 + $0x10] sm:$0xf]
    %v226 = vld [vmem:[%s220 + $0x14] sm:$0xf]
    %v227 = vld [vmem:[%s220 + $0x18] sm:$0xf]
    %v228 = vld [vmem:[%s220 + $0x1c] sm:$0xf]
    %v229 = vld [vmem:[%s220 + $0x20] sm:$0xf]
    %v230 = vld [vmem:[%s220 + $0x24] sm:$0xf]
    %v231 = vld [vmem:[%s220 + $0x28] sm:$0xf]
    %v232 = vld [vmem:[%s220 + $0x2c] sm:$0xf]
    %v233 = vld [vmem:[%s220 + $0x30] sm:$0xf]
    %v234 = vld [vmem:[%s220 + $0x34] sm:$0xf]
    %v235 = vld [vmem:[%s220 + $0x38] sm:$0xf]
    %v236 = vld [vmem:[%s220 + $0x3c] sm:$0xf]
    %s237 = scalar_lea.vmem %s4, 1
    %v238 = vld [vmem:[%s237] sm:$0x1]
    %v240 = vlaneseq
    %v241 = vshrl.u32 %v240, 7
    %v242 = vsub.s32 0, %v241
    %v243 = vrot.slane %v238, %v242
    %v261 = vunpack.c.l.b16 %v221
    %v262 = vunpack.c.l.b16 %v222
    %v263 = vunpack.c.l.b16 %v223
    %v264 = vunpack.c.l.b16 %v224
    %v265 = vunpack.c.l.b16 %v225
    %v266 = vunpack.c.l.b16 %v226
    %v267 = vunpack.c.l.b16 %v227
    %v268 = vunpack.c.l.b16 %v228
    %v269 = vunpack.c.l.b16 %v229
    %v270 = vunpack.c.l.b16 %v230
    %v271 = vunpack.c.l.b16 %v231
    %v272 = vunpack.c.l.b16 %v232
    %v273 = vunpack.c.l.b16 %v233
    %v274 = vunpack.c.l.b16 %v234
    %v275 = vunpack.c.l.b16 %v235
    %v276 = vunpack.c.l.b16 %v236
    %v277 = vpack.c.b16 %v262, %v261
    %v278 = vpack.c.b16 %v264, %v263
    %v279 = vpack.c.b16 %v266, %v265
    %v280 = vpack.c.b16 %v268, %v267
    %v281 = vpack.c.b16 %v270, %v269
    %v282 = vpack.c.b16 %v272, %v271
    %v283 = vpack.c.b16 %v274, %v273
    %v284 = vpack.c.b16 %v276, %v275
    %293 = vmatprep.subr.bf16.mxu0 0
    %294 = vmatpush1.bf16.msra.mxu0 %v277
    %295 = vmatprep.subr.bf16.mxu0 0
    %296 = vmatpush1.bf16.msra.mxu0 %v278
    %297 = vmatprep.subr.bf16.mxu0 0
    %298 = vmatpush1.bf16.msra.mxu0 %v279
    %299 = vmatprep.subr.bf16.mxu0 0
    %300 = vmatpush1.bf16.msra.mxu0 %v280
    %301 = vmatprep.subr.bf16.mxu0 0
    %302 = vmatpush1.bf16.msra.mxu0 %v281
    %303 = vmatprep.subr.bf16.mxu0 0
    %304 = vmatpush1.bf16.msra.mxu0 %v282
    %305 = vmatprep.subr.bf16.mxu0 0
    %306 = vmatpush1.bf16.msra.mxu0 %v283
    %307 = vmatprep.subr.bf16.mxu0 0
    %308 = vmatpush1.bf16.msra.mxu0 %v284
    %309 = vmatprep.subr.bf16.mxu0 0
    %310 = vmatpush1.bf16.msra.mxu0 0
    %311 = vmatprep.subr.bf16.mxu0 0
    %312 = vmatpush1.bf16.msra.mxu0 0
    %313 = vmatprep.subr.bf16.mxu0 0
    %314 = vmatpush1.bf16.msra.mxu0 0
    %315 = vmatprep.subr.bf16.mxu0 0
    %316 = vmatpush1.bf16.msra.mxu0 0
    %317 = vmatprep.subr.bf16.mxu0 0
    %318 = vmatpush1.bf16.msra.mxu0 0
    %319 = vmatprep.subr.bf16.mxu0 0
    %320 = vmatpush1.bf16.msra.mxu0 0
    %321 = vmatprep.subr.bf16.mxu0 0
    %322 = vmatpush1.bf16.msra.mxu0 0
    %323 = vmatprep.subr.bf16.mxu0 0
    %324 = vmatpush1.bf16.msra.mxu0 0
    %325 = vmatprep.mubr.bf16.mxu0 0
    %326 = vmatmul.mubr.bf16.gmra.mrb[0].mxu0 %v219
    %v327 = vpop.f32.mrb[0].mxu0
    %v328 = vadd.f32 %v243, %v327
    %v329 = vpop.f32.mrb[0].mxu0
    %v330 = vpop.f32.mrb[0].mxu0
    %v331 = vpop.f32.mrb[0].mxu0
    %332 = vdwg.mxu0
    %v333 = vmax.f32 %v328, 0.0
    %v334 = vpack.c.bf16 %v333, %v333
    %v335 = vld [vmem:[%s5] sm:$0xf]
    %v336 = vld [vmem:[%s5 + $0x4] sm:$0xf]
    %v337 = vld [vmem:[%s5 + $0x8] sm:$0xf]
    %v338 = vld [vmem:[%s5 + $0xc] sm:$0xf]
    %v339 = vld [vmem:[%s5 + $0x10] sm:$0xf]
    %v340 = vld [vmem:[%s5 + $0x14] sm:$0xf]
    %v341 = vld [vmem:[%s5 + $0x18] sm:$0xf]
    %v342 = vld [vmem:[%s5 + $0x1c] sm:$0xf]
    %v343 = vld [vmem:[%s5 + $0x20] sm:$0xf]
    %v344 = vld [vmem:[%s5 + $0x24] sm:$0xf]
    %v345 = vld [vmem:[%s5 + $0x28] sm:$0xf]
    %v346 = vld [vmem:[%s5 + $0x2c] sm:$0xf]
    %v347 = vld [vmem:[%s5 + $0x30] sm:$0xf]
    %v348 = vld [vmem:[%s5 + $0x34] sm:$0xf]
    %v349 = vld [vmem:[%s5 + $0x38] sm:$0xf]
    %v350 = vld [vmem:[%s5 + $0x3c] sm:$0xf]
    %v351 = vld [vmem:[%s6] sm:$0x1]
    %v353 = vlaneseq
    %v354 = vshrl.u32 %v353, 7
    %v355 = vsub.s32 0, %v354
    %v356 = vrot.slane %v351, %v355
    %v374 = vunpack.c.l.b16 %v335
    %v375 = vunpack.c.l.b16 %v336
    %v376 = vunpack.c.l.b16 %v337
    %v377 = vunpack.c.l.b16 %v338
    %v378 = vunpack.c.l.b16 %v339
    %v379 = vunpack.c.l.b16 %v340
    %v380 = vunpack.c.l.b16 %v341
    %v381 = vunpack.c.l.b16 %v342
    %v382 = vunpack.c.l.b16 %v343
    %v383 = vunpack.c.l.b16 %v344
    %v384 = vunpack.c.l.b16 %v345
    %v385 = vunpack.c.l.b16 %v346
    %v386 = vunpack.c.l.b16 %v347
    %v387 = vunpack.c.l.b16 %v348
    %v388 = vunpack.c.l.b16 %v349
    %v389 = vunpack.c.l.b16 %v350
    %v390 = vpack.c.b16 %v375, %v374
    %v391 = vpack.c.b16 %v377, %v376
    %v392 = vpack.c.b16 %v379, %v378
    %v393 = vpack.c.b16 %v381, %v380
    %v394 = vpack.c.b16 %v383, %v382
    %v395 = vpack.c.b16 %v385, %v384
    %v396 = vpack.c.b16 %v387, %v386
    %v397 = vpack.c.b16 %v389, %v388
    %406 = vmatprep.subr.bf16.mxu0 0
    %407 = vmatpush1.bf16.msra.mxu0 %v390
    %408 = vmatprep.subr.bf16.mxu0 0
    %409 = vmatpush1.bf16.msra.mxu0 %v391
    %410 = vmatprep.subr.bf16.mxu0 0
    %411 = vmatpush1.bf16.msra.mxu0 %v392
    %412 = vmatprep.subr.bf16.mxu0 0
    %413 = vmatpush1.bf16.msra.mxu0 %v393
    %414 = vmatprep.subr.bf16.mxu0 0
    %415 = vmatpush1.bf16.msra.mxu0 %v394
    %416 = vmatprep.subr.bf16.mxu0 0
    %417 = vmatpush1.bf16.msra.mxu0 %v395
    %418 = vmatprep.subr.bf16.mxu0 0
    %419 = vmatpush1.bf16.msra.mxu0 %v396
    %420 = vmatprep.subr.bf16.mxu0 0
    %421 = vmatpush1.bf16.msra.mxu0 %v397
    %422 = vmatprep.subr.bf16.mxu0 0
    %423 = vmatpush1.bf16.msra.mxu0 0
    %424 = vmatprep.subr.bf16.mxu0 0
    %425 = vmatpush1.bf16.msra.mxu0 0
    %426 = vmatprep.subr.bf16.mxu0 0
    %427 = vmatpush1.bf16.msra.mxu0 0
    %428 = vmatprep.subr.bf16.mxu0 0
    %429 = vmatpush1.bf16.msra.mxu0 0
    %430 = vmatprep.subr.bf16.mxu0 0
    %431 = vmatpush1.bf16.msra.mxu0 0
    %432 = vmatprep.subr.bf16.mxu0 0
    %433 = vmatpush1.bf16.msra.mxu0 0
    %434 = vmatprep.subr.bf16.mxu0 0
    %435 = vmatpush1.bf16.msra.mxu0 0
    %436 = vmatprep.subr.bf16.mxu0 0
    %437 = vmatpush1.bf16.msra.mxu0 0
    %438 = vmatprep.mubr.bf16.mxu0 0
    %439 = vmatmul.mubr.bf16.gmra.mrb[0].mxu0 %v334
    %v440 = vpop.f32.mrb[0].mxu0
    %v441 = vadd.f32 %v356, %v440
    %v442 = vpop.f32.mrb[0].mxu0
    %v443 = vpop.f32.mrb[0].mxu0
    %v444 = vpop.f32.mrb[0].mxu0
    %445 = vdwg.mxu0
    %v446 = vtanh.pop %v441
    %v447 = vmul.f32 %v446, 2.0
    %vm448 = vcmask 31744
    %449 = vst.msk [vmem:[%s7] sm:$0xff] %vm448, %v447
    // Predicated region
    $region34: #{tpu_custom_call.1} parent=1 // pred_check
      _
    $region35: #{tpu_custom_call.1} parent=1 // pred_check_branch
      %451 = sbr.rel (0) target = $region37
    $region36: #{tpu_custom_call.1} parent=1 // pred_region
      _
    $region37: #{tpu_custom_call.1} parent=1 // pred_fallthru
      _
    // Predicated region
    $region38: #{tpu_custom_call.1} parent=1 // pred_check
      _
    $region39: #{tpu_custom_call.1} parent=1 // pred_check_branch
      %453 = sbr.rel (0) target = $region41
    $region40: #{tpu_custom_call.1} parent=1 // pred_region
      _
    $region41: #{tpu_custom_call.1} parent=1 // pred_fallthru
      _
    %454 = vsyncpa [#allocation3], 1

</llo_original>
